<compile_context>
chip_gen: v7x
topology: tpu7x:2x2x1
jax: 0.10.0
libtpu: 0.0.40
codegen_flags: <defaults>
</compile_context>

<pallas_src>
import functools

import jax
import jax.numpy as jnp
import numpy as np
from jax import lax
from jax.experimental import pallas as pl
from jax.experimental.pallas import tpu as pltpu


def _round_up(x, m):
    return ((x + m - 1) // m) * m


def _splat_kernel(lin_ref, feats_ref, out_ref, *, hw, thw, tg, n_g):
    """One (batch b, cam*depth slab nd, HW-tile k) step."""
    nd = pl.program_id(1)
    k = pl.program_id(2)

    @pl.when(jnp.logical_and(nd == 0, k == 0))
    def _init():
        out_ref[...] = jnp.zeros_like(out_ref)

    lin = lin_ref[...]                                # (thw, 1) int32, invalid -> -1
    feats = feats_ref[...].astype(jnp.bfloat16)       # (C_f, thw) bf16 for the MXU

    if hw % thw != 0:
        # Ragged last HW tile: the block read past the array edge is
        # unspecified data, so force those feature columns to exact zero.
        p_iota = lax.broadcasted_iota(jnp.int32, (1, thw), 1)
        in_tile = (k * thw + p_iota) < hw             # (1, thw)
        feats = jnp.where(in_tile, feats, jnp.zeros_like(feats))

    # One-hot built chunk-by-chunk over the BEV axis; int32 compare, cast to
    # bf16 only for the MXU (validity is already folded into lin == -1).
    g_iota = lax.broadcasted_iota(jnp.int32, (thw, tg), 1)
    for gi in range(n_g):
        g0 = gi * tg
        tgt = lin if g0 == 0 else lin - g0            # (thw, 1) shift, not (thw, tg)
        onehot = (g_iota == tgt).astype(jnp.bfloat16)  # (thw, tg)
        out_ref[:, g0:g0 + tg] += jnp.dot(
            feats, onehot, preferred_element_type=jnp.float32)


def splat(coords_world, lifted_features, bev_grid, bev_resolution, *,
          tp=256, tg=2048):
    """Pallas implementation of SplatModule.forward.

    coords_world:    [B, Ncam, D, H_f, W_f, 3]
    lifted_features: [B, Ncam, D, C_f, H_f, W_f]
    returns:         [B, C_f, bev_H, bev_W] float32
    """
    assert tp % 128 == 0 and tg % 128 == 0

    x_min, x_max = float(bev_grid[0][0]), float(bev_grid[0][1])
    y_min, y_max = float(bev_grid[1][0]), float(bev_grid[1][1])
    bev_W = int((x_max - x_min) / bev_resolution)
    bev_H = int((y_max - y_min) / bev_resolution)
    G = bev_H * bev_W

    B, Ncam, D, C_f, H_f, W_f = lifted_features.shape
    ND = Ncam * D
    HW = H_f * W_f

    # Point tile along the contiguous H*W axis of each (cam, depth) slab.
    thw = HW if HW <= tp else tp
    n_hw = -(-HW // thw)

    # BEV lane axis: pad G to a multiple of the chunk so in-kernel slices are
    # static and lane-dense; padded bins are cropped in the glue.
    tg_eff = min(tg, _round_up(G, 128))
    G_pad = _round_up(G, tg_eff)
    n_g = G_pad // tg_eff

    # ---- glue: no transpose / no pad / no cast copy of lifted_features ----
    feats = lifted_features.reshape(B, ND, C_f, HW)   # contiguous merge: free
    x = coords_world[..., 0].astype(jnp.float32)
    y = coords_world[..., 1].astype(jnp.float32)
    # Same formula as torch; float->int cast truncates toward zero like .long()
    xi = ((x - x_min) / (x_max - x_min) * bev_W).astype(jnp.int32)
    yi = ((y - y_min) / (y_max - y_min) * bev_H).astype(jnp.int32)
    valid = (xi >= 0) & (xi < bev_W) & (yi >= 0) & (yi < bev_H)
    lin = jnp.where(valid, yi * bev_W + xi, -1).astype(jnp.int32)
    lin = lin.reshape(B, ND, HW, 1)

    kernel = functools.partial(_splat_kernel, hw=HW, thw=thw, tg=tg_eff, n_g=n_g)

    grid_spec = pltpu.PrefetchScalarGridSpec(
        num_scalar_prefetch=0,
        grid=(B, ND, n_hw),
        in_specs=[
            pl.BlockSpec((None, None, thw, 1), lambda b, nd, k: (b, nd, k, 0)),
            pl.BlockSpec((None, None, C_f, thw), lambda b, nd, k: (b, nd, 0, k)),
        ],
        out_specs=pl.BlockSpec((None, C_f, G_pad), lambda b, nd, k: (b, 0, 0)),
    )

    # VMEM budget: resident accumulator + double-buffered tiles + one-hot chunk.
    itemsize = jnp.dtype(lifted_features.dtype).itemsize
    est = (2 * C_f * G_pad * 4            # resident f32 accumulator (+writeback)
           + 2 * C_f * thw * itemsize     # double-buffered feats tiles
           + 2 * thw * 128 * 4            # double-buffered lin tiles (lane pad)
           + 2 * thw * tg_eff * 2         # one-hot chunk temporaries
           + (8 << 20))                   # headroom
    vmem_limit = int(min(max(est, 32 << 20), 64 << 20))   # 64 MiB = v7x physical

    flops = 2 * B * ND * n_hw * thw * C_f * G_pad
    bytes_accessed = (feats.size * itemsize + lin.size * 4 + B * C_f * G_pad * 4)

    out_flat = pl.pallas_call(
        kernel,
        out_shape=jax.ShapeDtypeStruct((B, C_f, G_pad), jnp.float32),
        grid_spec=grid_spec,
        compiler_params=pltpu.CompilerParams(
            dimension_semantics=("parallel", "arbitrary", "arbitrary"),
            vmem_limit_bytes=vmem_limit),
        cost_estimate=pl.CostEstimate(
            flops=int(flops), transcendentals=0,
            bytes_accessed=int(bytes_accessed)),
    )(lin, feats)

    return out_flat[..., :G].reshape(B, C_f, bev_H, bev_W)


def _reference(coords_world, lifted_features, bev_grid, bev_resolution):
    """Pure-JAX reference matching the PyTorch scatter_add semantics.

    Features are quantized to bf16 (then accumulated in f32) exactly like the
    kernel, so the comparison tolerance can stay tight; the bf16 MXU path is a
    deliberate perf choice (per-element relative error <= ~2^-8).
    """
    x_min, x_max = float(bev_grid[0][0]), float(bev_grid[0][1])
    y_min, y_max = float(bev_grid[1][0]), float(bev_grid[1][1])
    bev_W = int((x_max - x_min) / bev_resolution)
    bev_H = int((y_max - y_min) / bev_resolution)
    G = bev_H * bev_W

    B, Ncam, D, C_f, H_f, W_f = lifted_features.shape
    P = Ncam * D * H_f * W_f

    xs = coords_world[..., 0].reshape(B, P).astype(jnp.float32)
    ys = coords_world[..., 1].reshape(B, P).astype(jnp.float32)
    feats = jnp.transpose(lifted_features, (0, 3, 1, 2, 4, 5)).reshape(B, C_f, P)
    feats = feats.astype(jnp.bfloat16).astype(jnp.float32)

    xi = ((xs - x_min) / (x_max - x_min) * bev_W).astype(jnp.int32)
    yi = ((ys - y_min) / (y_max - y_min) * bev_H).astype(jnp.int32)
    valid = (xi >= 0) & (xi < bev_W) & (yi >= 0) & (yi < bev_H)
    lin = jnp.where(valid, yi * bev_W + xi, G)   # invalid -> dump bin

    out = jnp.zeros((B, C_f, G + 1), jnp.float32)
    b_idx = jnp.arange(B)[:, None, None]
    c_idx = jnp.arange(C_f)[None, :, None]
    out = out.at[b_idx, c_idx, lin[:, None, :]].add(feats)
    return out[..., :G].reshape(B, C_f, bev_H, bev_W)


if __name__ == "__main__":
    key = jax.random.PRNGKey(0)
    k1, k2, k3, k4 = jax.random.split(key, 4)

    # Asymmetric BEV grid to catch any H/W index swap: bev_W=16, bev_H=12.
    bev_grid = ((-8.0, 8.0), (-4.0, 8.0))
    bev_resolution = 1.0

    # Case 1: default tiling (single HW tile per slab, single G chunk).
    B, Ncam, D, C_f, H_f, W_f = 2, 2, 4, 8, 8, 8
    coords_world = jax.random.uniform(
        k1, (B, Ncam, D, H_f, W_f, 3), minval=-10.0, maxval=10.0,
        dtype=jnp.float32)
    lifted_features = jax.random.normal(
        k2, (B, Ncam, D, C_f, H_f, W_f), dtype=jnp.float32)

    bev = jax.block_until_ready(
        splat(coords_world, lifted_features, bev_grid, bev_resolution))
    ref = jax.block_until_ready(
        _reference(coords_world, lifted_features, bev_grid, bev_resolution))
    np.testing.assert_allclose(np.asarray(bev), np.asarray(ref),
                               rtol=1e-4, atol=1e-4)
    assert bev.shape == (B, C_f, 12, 16) and bev.dtype == jnp.float32

    # Case 2: force ragged HW tiles (HW=144 > tp=128), multiple G chunks and a
    # padded BEV lane axis (G=192 -> G_pad=256).
    B2, N2, D2, C2, H2, W2 = 1, 1, 2, 8, 12, 12
    coords2 = jax.random.uniform(
        k3, (B2, N2, D2, H2, W2, 3), minval=-10.0, maxval=10.0,
        dtype=jnp.float32)
    feats2 = jax.random.normal(k4, (B2, N2, D2, C2, H2, W2), dtype=jnp.float32)

    bev2 = jax.block_until_ready(
        splat(coords2, feats2, bev_grid, bev_resolution, tp=128, tg=128))
    ref2 = jax.block_until_ready(
        _reference(coords2, feats2, bev_grid, bev_resolution))
    np.testing.assert_allclose(np.asarray(bev2), np.asarray(ref2),
                               rtol=1e-4, atol=1e-4)
    assert bev2.shape == (B2, C2, 12, 16) and bev2.dtype == jnp.float32

    print("KERNEL_OK")
</pallas_src>

<mosaic_0001>
module attributes {stable_mosaic.version = 11 : i64} {
  func.func @_splat_kernel(%arg0: i32, %arg1: i32, %arg2: i32, %arg3: memref<1x1x64x1xi32, #tpu.memory_space<vmem>>, %arg4: memref<1x1x8x64xf32, #tpu.memory_space<vmem>>, %arg5: memref<1x8x256xf32, #tpu.memory_space<vmem>>) attributes {dimension_semantics = [#tpu.dimension_semantics<parallel>, #tpu.dimension_semantics<arbitrary>, #tpu.dimension_semantics<arbitrary>], iteration_bounds = array<i64: 2, 8, 1>, scalar_prefetch = 0 : i64, scratch_operands = 0 : i64, tpu.core_type = #tpu.core_type<tc>, window_params = [{transform_indices = @transform_0, window_bounds = array<i64: 1, 1, 64, 1>}, {transform_indices = @transform_1, window_bounds = array<i64: 1, 1, 8, 64>}, {transform_indices = @transform_2, window_bounds = array<i64: 1, 8, 256>}]} {
    %c0_i32 = arith.constant 0 : i32
    %0 = arith.cmpi eq, %arg1, %c0_i32 : i32
    %c0_i32_0 = arith.constant 0 : i32
    %1 = arith.cmpi eq, %arg2, %c0_i32_0 : i32
    %2 = arith.andi %0, %1 : i1
    %3 = arith.extui %2 : i1 to i32
    %c0_i32_1 = arith.constant 0 : i32
    %4 = arith.cmpi ne, %3, %c0_i32_1 : i32
    scf.if %4 {
      %cst_15 = arith.constant 0.000000e+00 : f32
      %23 = vector.broadcast %cst_15 : f32 to vector<8x256xf32>
      %c0_16 = arith.constant 0 : index
      %c0_17 = arith.constant 0 : index
      %c0_18 = arith.constant 0 : index
      %24 = vector.load %arg5[%c0_16, %c0_17, %c0_18] : memref<1x8x256xf32, #tpu.memory_space<vmem>>, vector<1x8x256xf32>
      %25 = vector.shape_cast %24 : vector<1x8x256xf32> to vector<8x256xf32>
      %26 = vector.shape_cast %23 : vector<8x256xf32> to vector<1x8x256xf32>
      tpu.vector_store %arg5[%c0_16, %c0_17, %c0_18], %26 {strides = array<i32>} : memref<1x8x256xf32, #tpu.memory_space<vmem>>, vector<1x8x256xf32>,
    } else {
    }
    %c0 = arith.constant 0 : index
    %c0_2 = arith.constant 0 : index
    %c0_3 = arith.constant 0 : index
    %c0_4 = arith.constant 0 : index
    %5 = vector.load %arg3[%c0, %c0_2, %c0_3, %c0_4] : memref<1x1x64x1xi32, #tpu.memory_space<vmem>>, vector<1x1x64x1xi32>
    %6 = vector.shape_cast %5 : vector<1x1x64x1xi32> to vector<64x1xi32>
    %c0_5 = arith.constant 0 : index
    %c0_6 = arith.constant 0 : index
    %c0_7 = arith.constant 0 : index
    %c0_8 = arith.constant 0 : index
    %7 = vector.load %arg4[%c0_5, %c0_6, %c0_7, %c0_8] : memref<1x1x8x64xf32, #tpu.memory_space<vmem>>, vector<1x1x8x64xf32>
    %8 = vector.shape_cast %7 : vector<1x1x8x64xf32> to vector<8x64xf32>
    %9 = arith.truncf %8 : vector<8x64xf32> to vector<8x64xbf16>
    %10 = tpu.iota {dimensions = array<i32: 1>} : vector<64x256xi32>
    %11 = vector.broadcast %6 : vector<64x1xi32> to vector<64x256xi32>
    %12 = arith.cmpi eq, %10, %11 : vector<64x256xi32>
    %13 = arith.extui %12 : vector<64x256xi1> to vector<64x256xi32>
    %14 = arith.sitofp %13 : vector<64x256xi32> to vector<64x256xf32>
    %15 = arith.truncf %14 : vector<64x256xf32> to vector<64x256xbf16>
    %c0_9 = arith.constant 0 : index
    %c0_10 = arith.constant 0 : index
    %c0_11 = arith.constant 0 : index
    %16 = vector.load %arg5[%c0_9, %c0_10, %c0_11] : memref<1x8x256xf32, #tpu.memory_space<vmem>>, vector<1x8x256xf32>
    %17 = vector.shape_cast %16 : vector<1x8x256xf32> to vector<8x256xf32>
    %cst = arith.constant dense<0.000000e+00> : vector<8x256xf32>
    %18 = tpu.matmul %9, %15, %cst {dimension_numbers = #tpu.dot_dimension_numbers<[1], [0], [0], [1], [0, 0, 1, 1], [], []>} : vector<8x64xbf16>, vector<64x256xbf16>, vector<8x256xf32> -> vector<8x256xf32>
    %19 = arith.addf %17, %18 : vector<8x256xf32>
    %c0_12 = arith.constant 0 : index
    %c0_13 = arith.constant 0 : index
    %c0_14 = arith.constant 0 : index
    %20 = vector.load %arg5[%c0_12, %c0_13, %c0_14] : memref<1x8x256xf32, #tpu.memory_space<vmem>>, vector<1x8x256xf32>
    %21 = vector.shape_cast %20 : vector<1x8x256xf32> to vector<8x256xf32>
    %22 = vector.shape_cast %19 : vector<8x256xf32> to vector<1x8x256xf32>
    tpu.vector_store %arg5[%c0_12, %c0_13, %c0_14], %22 {strides = array<i32>} : memref<1x8x256xf32, #tpu.memory_space<vmem>>, vector<1x8x256xf32>,
    return
  }
  func.func @transform_0(%arg0: i32, %arg1: i32, %arg2: i32) -> (i32, i32, i32, i32) {
    %c0_i32 = arith.constant 0 : i32
    %c0_i32_0 = arith.constant 0 : i32
    return %arg0, %arg1, %arg2, %c0_i32 : i32, i32, i32, i32
  }
  func.func @transform_1(%arg0: i32, %arg1: i32, %arg2: i32) -> (i32, i32, i32, i32) {
    %c0_i32 = arith.constant 0 : i32
    %c0_i32_0 = arith.constant 0 : i32
    return %arg0, %arg1, %c0_i32, %arg2 : i32, i32, i32, i32
  }
  func.func @transform_2(%arg0: i32, %arg1: i32, %arg2: i32) -> (i32, i32, i32) {
    %c0_i32 = arith.constant 0 : i32
    %c0_i32_0 = arith.constant 0 : i32
    %c0_i32_1 = arith.constant 0 : i32
    return %arg0, %c0_i32, %c0_i32_0 : i32, i32, i32
  }
}

</mosaic_0001>

<llo_original>
// kernel: tpu_custom_call.1
$region0: #{tpu_custom_call.1}
  #allocation0 [shape = 'u32[]', space=smem, size = 0x4, offset = 0x4, fixed_abs, tag = 'smem constant byte address 0x4 - core index']
  #allocation1 [shape = 'u32[144,128]{1,0:T(1,128)}', space=vmem, size = 0x12000, scoped, tag = 'internal scratch']
  %s0 = inlined_call_operand.vmem [shape: s32[2,8,64,1], index: 0, kind: input, shape index: {}]
  %s1 = inlined_call_operand.vmem [shape: f32[2,8,8,64], index: 1, kind: input, shape index: {}]
  %s2 = inlined_call_operand.hbm [shape: f32[2,8,256], index: 2, kind: output, shape index: {}]
  %s3 = sld [smem:[#allocation0]]
  $region45: #{tpu_custom_call.1} parent=0
    _
  %s5 = ssub.s32 1, %s3
  %s6 = scalar_select 0, %s5, %s3
  $region1: #{tpu_custom_call.1} parent=0
    #allocation2 [shape = 'u8[16384]{0}', space=vmem, size = 0x4000, scoped, tag = 'output window, operand 0']
    #allocation3 [shape = 's32[2]{0}', space=sflag, size = 0x8, scoped, tag = 'scoped memory for tpu_custom_call.1']
    %7 = vsyncpa [#allocation3], 0
    %s8 = scalar_lea.sflag [#allocation3], 1
    %9 = vsyncpa %s8, 0
    loop: start=0, step=1, limit=18
    $region2: #{tpu_custom_call.1} parent=1 // loop_pre_header
      _
    $region3: #{tpu_custom_call.1} parent=1 // loop_header
      %s11 = sphi 0, %s15
      %p12 = scmp.ge.s32.totalorder %s11, 18
      %s18 = sphi 0, %s37
      %s19 = sphi 0, %s33
      %s20 = sphi 0, %s29
      %s21 = sphi 0, %s18
      %s22 = sphi 0, %s19
      %s23 = sphi 0, %s20
      %s24 = sphi 0, %s21
      %s25 = sphi 0, %s22
      %s26 = sphi 0, %s23
      %s44 = sphi 0, %s46
      %s47 = sphi 0, %s44
      %s48 = sphi 0, %s47
      %s64 = sphi 0, %s48
      %s74 = sphi 0, %s76
      %s77 = sphi 0, %s74
      %s78 = sphi 0, %s77
      %s94 = sphi 0, %s78
      %s100 = sphi 0, %s102
      %s103 = sphi 0, %s100
      %s104 = sphi 0, %s103
      %s120 = sphi 0, %s104
    $region4: #{tpu_custom_call.1} parent=1 // loop_header_branch
      %14 = sbr.rel (%p12) target = $region8
    $region5: #{tpu_custom_call.1} parent=1 // loop_body
      %s16 = ssub.s32 %s11, 1
      %s17 = ssub.s32 %s11, 2
      %s27 = sadd.s32 1, %s20
      %p28 = scmp.ge.s32.totalorder %s27, 1
      %s29 = scalar_select %p28, 0, %s27
      %s30 = sadd.s32 1, %s19
      %s31 = scalar_select %p28, %s30, %s19
      %p32 = scmp.ge.s32.totalorder %s31, 8
      %s33 = scalar_select %p32, 0, %s31
      %s34 = sadd.s32 1, %s18
      %s35 = scalar_select %p32, %s34, %s18
      %p36 = scmp.ge.s32.totalorder %s35, 2
      %s37 = scalar_select %p36, 0, %s35
      %s38 = ssub.s32 %s18, %s37
      %s39 = ssub.s32 %s19, %s33
      %s40 = sor.u32 %s38, %s39
      %s41 = ssub.s32 %s20, %s29
      %s42 = sor.u32 %s40, %s41
      %p43 = scmp.eq.s32.totalorder %s42, 0
      %s45 = sadd.s32 %s44, 1
      %s46 = scalar_select %p43, %s44, %s45
      %p49 = pneg %p43
      %p50 = scmp.eq.s32.totalorder %s11, 15
      %p51 = por %p49, %p50
      %p52 = scmp.ne.s32.totalorder %s44, %s47
      %p53 = scmp.eq.s32.totalorder %s11, 0
      %p54 = por %p52, %p53
      %p55 = scmp.ne.s32.totalorder %s44, %s47
      %p56 = scmp.eq.s32.totalorder %s16, 15
      %p57 = por %p55, %p56
      %p58 = scmp.ne.s32.totalorder %s47, %s48
      %p59 = scmp.eq.s32.totalorder %s16, 0
      %p60 = por %p58, %p59
      %p61 = scmp.ne.s32.totalorder %s47, %s48
      %p62 = scmp.eq.s32.totalorder %s17, 15
      %p63 = por %p61, %p62
      %p65 = scmp.ne.s32.totalorder %s48, %s64
      %p66 = scmp.eq.s32.totalorder %s17, 0
      %p67 = por %p65, %p66
      %s68 = ssub.s32 %s18, %s37
      %s69 = ssub.s32 %s19, %s33
      %s70 = sor.u32 %s68, %s69
      %s71 = ssub.s32 %s20, %s29
      %s72 = sor.u32 %s70, %s71
      %p73 = scmp.eq.s32.totalorder %s72, 0
      %s75 = sadd.s32 %s74, 1
      %s76 = scalar_select %p73, %s74, %s75
      %p79 = pneg %p73
      %p80 = scmp.eq.s32.totalorder %s11, 15
      %p81 = por %p79, %p80
      %p82 = scmp.ne.s32.totalorder %s74, %s77
      %p83 = scmp.eq.s32.totalorder %s11, 0
      %p84 = por %p82, %p83
      %p85 = scmp.ne.s32.totalorder %s74, %s77
      %p86 = scmp.eq.s32.totalorder %s16, 15
      %p87 = por %p85, %p86
      %p88 = scmp.ne.s32.totalorder %s77, %s78
      %p89 = scmp.eq.s32.totalorder %s16, 0
      %p90 = por %p88, %p89
      %p91 = scmp.ne.s32.totalorder %s77, %s78
      %p92 = scmp.eq.s32.totalorder %s17, 15
      %p93 = por %p91, %p92
      %p95 = scmp.ne.s32.totalorder %s78, %s94
      %p96 = scmp.eq.s32.totalorder %s17, 0
      %p97 = por %p95, %p96
      %s98 = ssub.s32 %s18, %s37
      %p99 = scmp.eq.s32.totalorder %s98, 0
      %s101 = sadd.s32 %s100, 1
      %s102 = scalar_select %p99, %s100, %s101
      %p105 = pneg %p99
      %p106 = scmp.eq.s32.totalorder %s11, 15
      %p107 = por %p105, %p106
      %p108 = scmp.ne.s32.totalorder %s100, %s103
      %p109 = scmp.eq.s32.totalorder %s11, 0
      %p110 = por %p108, %p109
      %p111 = scmp.ne.s32.totalorder %s100, %s103
      %p112 = scmp.eq.s32.totalorder %s16, 15
      %p113 = por %p111, %p112
      %p114 = scmp.ne.s32.totalorder %s103, %s104
      %p115 = scmp.eq.s32.totalorder %s16, 0
      %p116 = por %p114, %p115
      %p117 = scmp.ne.s32.totalorder %s103, %s104
      %p118 = scmp.eq.s32.totalorder %s17, 15
      %p119 = por %p117, %p118
      %p121 = scmp.ne.s32.totalorder %s104, %s120
      %p122 = scmp.eq.s32.totalorder %s17, 0
      %p123 = por %p121, %p122
      %p124 = scmp.le.s32.totalorder 1, %s11
      %p125 = scmp.lt.s32.totalorder %s11, 17
      %p126 = pnand %p124, %p125
      %p127 = pneg %p126
      // Predicated region
      $region9: #{tpu_custom_call.1} parent=5 // pred_check
        _
      $region10: #{tpu_custom_call.1} parent=5 // pred_check_branch
        %129 = sbr.rel (%p126) target = $region12
      $region11: #{tpu_custom_call.1} parent=5 // pred_region
        %s130 = ssub.s32 %s11, 1
      $region12: #{tpu_custom_call.1} parent=5 // pred_fallthru
        _
      %p131 = scmp.lt.s32.totalorder %s11, 16
      // Predicated region
      $region13: #{tpu_custom_call.1} parent=5 // pred_check
        %p132 = pneg %p131
      $region14: #{tpu_custom_call.1} parent=5 // pred_check_branch
        %134 = sbr.rel (%p132) target = $region16
      $region15: #{tpu_custom_call.1} parent=5 // pred_region
        // Predicated region
        $region17: #{tpu_custom_call.1} parent=15 // pred_check
          %p135 = pneg %p54
        $region18: #{tpu_custom_call.1} parent=15 // pred_check_branch
          %137 = sbr.rel (%p135) target = $region20
        $region19: #{tpu_custom_call.1} parent=15 // pred_region
          %s138 = smul.u32 8, %s20
          %p139 = scmp.lt.s32.totalorder %s18, 1
          %s140 = scalar_select %p139, %s18, 1
          %p141 = scmp.lt.s32.totalorder %s19, 7
          %s142 = scalar_select %p141, %s19, 7
          %p143 = scmp.lt.s32.totalorder %s138, 7
          %s144 = scalar_select %p143, %s138, 7
          %s145 = smul.addr %s142, 8
          %s146 = sadd.s32 %s144, %s145
          %s147 = smul.addr %s140, 64
          %s148 = sadd.s32 %s146, %s147
          %s149 = smul.addr %s148, 8
          %s150 = scalar_lea.vmem %s0, %s149
          %s151 = smul.u32 8, %s20
        $region20: #{tpu_custom_call.1} parent=15 // pred_fallthru
          _
        // Predicated region
        $region21: #{tpu_custom_call.1} parent=15 // pred_check
          %p152 = pneg %p84
        $region22: #{tpu_custom_call.1} parent=15 // pred_check_branch
          %154 = sbr.rel (%p152) target = $region24
        $region23: #{tpu_custom_call.1} parent=15 // pred_region
          %p155 = scmp.lt.s32.totalorder %s18, 1
          %s156 = scalar_select %p155, %s18, 1
          %p157 = scmp.lt.s32.totalorder %s19, 7
          %s158 = scalar_select %p157, %s19, 7
          %p159 = scmp.lt.s32.totalorder %s20, 0
          %s160 = scalar_select %p159, %s20, 0
          %s161 = sadd.s32 %s160, %s158
          %s162 = smul.addr %s156, 8
          %s163 = sadd.s32 %s161, %s162
          %s164 = smul.addr %s163, 8
          %s165 = scalar_lea.vmem %s1, %s164
        $region24: #{tpu_custom_call.1} parent=15 // pred_fallthru
          _
      $region16: #{tpu_custom_call.1} parent=5 // pred_fallthru
        _
      %p166 = scmp.le.s32.totalorder 1, %s11
      %p167 = scmp.lt.s32.totalorder %s11, 17
      %p168 = pnand %p166, %p167
      %p169 = pneg %p168
      // Predicated region
      $region25: #{tpu_custom_call.1} parent=5 // pred_check
        _
      $region26: #{tpu_custom_call.1} parent=5 // pred_check_branch
        %171 = sbr.rel (%p168) target = $region28
      $region27: #{tpu_custom_call.1} parent=5 // pred_region
        %s172 = ssub.s32 %s11, 1
        %s173 = smul.u32 8, %s23
        %p174 = scmp.lt.s32.totalorder %s21, 1
        %s175 = scalar_select %p174, %s21, 1
        %p176 = scmp.lt.s32.totalorder %s22, 7
        %s177 = scalar_select %p176, %s22, 7
        %p178 = scmp.lt.s32.totalorder %s173, 7
        %s179 = scalar_select %p178, %s173, 7
        %s180 = smul.addr %s177, 8
        %s181 = sadd.s32 %s179, %s180
        %s182 = smul.addr %s175, 64
        %s183 = sadd.s32 %s181, %s182
        %s184 = smul.addr %s183, 8
        %s185 = scalar_lea.vmem %s0, %s184
        %p186 = pneg %p60
        %p187 = pneg %p57
        %p188 = scmp.lt.s32.totalorder %s21, 1
        %s189 = scalar_select %p188, %s21, 1
        %p190 = scmp.lt.s32.totalorder %s22, 7
        %s191 = scalar_select %p190, %s22, 7
        %p192 = scmp.lt.s32.totalorder %s23, 0
        %s193 = scalar_select %p192, %s23, 0
        %s194 = sadd.s32 %s193, %s191
        %s195 = smul.addr %s189, 8
        %s196 = sadd.s32 %s194, %s195
        %s197 = smul.addr %s196, 8
        %s198 = scalar_lea.vmem %s1, %s197
        %p199 = pneg %p90
        %p200 = pneg %p87
        %p201 = pneg %p116
        %p202 = pneg %p113
        %s203 = sand.u32 %s103, 1
        %s204 = scalar_lea.sflag [#allocation3], %s203
        %s205 = sand.u32 %s103, 1
        %s206 = smul.addr %s205, 16
        %s207 = scalar_lea.vmem [#allocation2], %s206
        %s208 = smul.u32 8, %s23
        %p209 = scmp.lt.s32.totalorder %s21, 1
        %s210 = scalar_select %p209, %s21, 1
        %p211 = scmp.lt.s32.totalorder %s22, 7
        %s212 = scalar_select %p211, %s22, 7
        %p213 = scmp.lt.s32.totalorder %s208, 7
        %s214 = scalar_select %p213, %s208, 7
        %s215 = smul.addr %s212, 8
        %s216 = sadd.s32 %s214, %s215
        %s217 = smul.addr %s210, 64
        %s218 = sadd.s32 %s216, %s217
        %s219 = smul.addr %s218, 8
        %s220 = scalar_lea.vmem %s0, %s219
        %s221 = smul.u32 8, %s23
        %p222 = scmp.lt.s32.totalorder %s21, 1
        %s223 = scalar_select %p222, %s21, 1
        %p224 = scmp.lt.s32.totalorder %s22, 7
        %s225 = scalar_select %p224, %s22, 7
        %p226 = scmp.lt.s32.totalorder %s23, 0
        %s227 = scalar_select %p226, %s23, 0
        %s228 = sadd.s32 %s227, %s225
        %s229 = smul.addr %s223, 8
        %s230 = sadd.s32 %s228, %s229
        %s231 = smul.addr %s230, 8
        %s232 = scalar_lea.vmem %s1, %s231
        %p234 = scmp.eq.s32.totalorder %s22, 0
        %p235 = scmp.eq.s32.totalorder %s23, 0
        %p236 = pnand %p234, %p235
        %p237 = pneg %p236
        // Predicated region
        $region29: #{tpu_custom_call.1} parent=27 // pred_check
          _
        $region30: #{tpu_custom_call.1} parent=27 // pred_check_branch
          %239 = sbr.rel (%p236) target = $region32
        $region31: #{tpu_custom_call.1} parent=27 // pred_region
          %240 = vst [vmem:[%s207] sm:$0xff] 0.0
          %241 = vst [vmem:[%s207 + $0x8] sm:$0xff] 0.0
        $region32: #{tpu_custom_call.1} parent=27 // pred_fallthru
          _
        %v242 = vld [vmem:[%s220] sm:$0xff]
        %v243 = vld [vmem:[%s220 + $0x8] sm:$0xff]
        %v244 = vld [vmem:[%s220 + $0x10] sm:$0xff]
        %v245 = vld [vmem:[%s220 + $0x18] sm:$0xff]
        %v246 = vld [vmem:[%s220 + $0x20] sm:$0xff]
        %v247 = vld [vmem:[%s220 + $0x28] sm:$0xff]
        %v248 = vld [vmem:[%s220 + $0x30] sm:$0xff]
        %v249 = vld [vmem:[%s220 + $0x38] sm:$0xff]
        %v250 = vld [vmem:[%s232] sm:$0xff]
        %v251 = vpack.c.bf16 %v250, %v250
        %v252 = vlaneseq
        %v253 = vand.u32 %v252, 127
        %v254 = vadd.s32 %v253, 128
        %255 = vset.pattern.permute.xlu0 0
        %256 = vperm.xlu0 %255, %v242
        %v257 = vpop.permute.xlu0 %256
        %258 = vset.pattern.permute.xlu0 0
        %259 = vperm.xlu0 %258, %v243
        %v260 = vpop.permute.xlu0 %259
        %261 = vset.pattern.permute.xlu0 0
        %262 = vperm.xlu0 %261, %v244
        %v263 = vpop.permute.xlu0 %262
        %264 = vset.pattern.permute.xlu0 0
        %265 = vperm.xlu0 %264, %v245
        %v266 = vpop.permute.xlu0 %265
        %267 = vset.pattern.permute.xlu0 0
        %268 = vperm.xlu0 %267, %v246
        %v269 = vpop.permute.xlu0 %268
        %270 = vset.pattern.permute.xlu0 0
        %271 = vperm.xlu0 %270, %v247
        %v272 = vpop.permute.xlu0 %271
        %273 = vset.pattern.permute.xlu0 0
        %274 = vperm.xlu0 %273, %v248
        %v275 = vpop.permute.xlu0 %274
        %276 = vset.pattern.permute.xlu0 0
        %277 = vperm.xlu0 %276, %v249
        %v278 = vpop.permute.xlu0 %277
        %vm279 = vcmp.eq.s32.totalorder %v253, %v257
        %vm280 = vcmp.eq.s32.totalorder %v254, %v257
        %vm281 = vcmp.eq.s32.totalorder %v253, %v260
        %vm282 = vcmp.eq.s32.totalorder %v254, %v260
        %vm283 = vcmp.eq.s32.totalorder %v253, %v263
        %vm284 = vcmp.eq.s32.totalorder %v254, %v263
        %vm285 = vcmp.eq.s32.totalorder %v253, %v266
        %vm286 = vcmp.eq.s32.totalorder %v254, %v266
        %vm287 = vcmp.eq.s32.totalorder %v253, %v269
        %vm288 = vcmp.eq.s32.totalorder %v254, %v269
        %vm289 = vcmp.eq.s32.totalorder %v253, %v272
        %vm290 = vcmp.eq.s32.totalorder %v254, %v272
        %vm291 = vcmp.eq.s32.totalorder %v253, %v275
        %vm292 = vcmp.eq.s32.totalorder %v254, %v275
        %vm293 = vcmp.eq.s32.totalorder %v253, %v278
        %vm294 = vcmp.eq.s32.totalorder %v254, %v278
        %v295 = vsel %vm279, 1, 0
        %v296 = vsel %vm280, 1, 0
        %v297 = vsel %vm281, 1, 0
        %v298 = vsel %vm282, 1, 0
        %v299 = vsel %vm283, 1, 0
        %v300 = vsel %vm284, 1, 0
        %v301 = vsel %vm285, 1, 0
        %v302 = vsel %vm286, 1, 0
        %v303 = vsel %vm287, 1, 0
        %v304 = vsel %vm288, 1, 0
        %v305 = vsel %vm289, 1, 0
        %v306 = vsel %vm290, 1, 0
        %v307 = vsel %vm291, 1, 0
        %v308 = vsel %vm292, 1, 0
        %v309 = vsel %vm293, 1, 0
        %v310 = vsel %vm294, 1, 0
        %v311 = vcvt.s32.f32 %v295
        %v312 = vcvt.s32.f32 %v296
        %v313 = vcvt.s32.f32 %v297
        %v314 = vcvt.s32.f32 %v298
        %v315 = vcvt.s32.f32 %v299
        %v316 = vcvt.s32.f32 %v300
        %v317 = vcvt.s32.f32 %v301
        %v318 = vcvt.s32.f32 %v302
        %v319 = vcvt.s32.f32 %v303
        %v320 = vcvt.s32.f32 %v304
        %v321 = vcvt.s32.f32 %v305
        %v322 = vcvt.s32.f32 %v306
        %v323 = vcvt.s32.f32 %v307
        %v324 = vcvt.s32.f32 %v308
        %v325 = vcvt.s32.f32 %v309
        %v326 = vcvt.s32.f32 %v310
        %v327 = vpack.c.bf16 %v313, %v311
        %v328 = vpack.c.bf16 %v314, %v312
        %v329 = vpack.c.bf16 %v317, %v315
        %v330 = vpack.c.bf16 %v318, %v316
        %v331 = vpack.c.bf16 %v321, %v319
        %v332 = vpack.c.bf16 %v322, %v320
        %v333 = vpack.c.bf16 %v325, %v323
        %v334 = vpack.c.bf16 %v326, %v324
        %v335 = vld [vmem:[%s207] sm:$0xff]
        %v336 = vld [vmem:[%s207 + $0x8] sm:$0xff]
        %vm337 = vcmask 523264
        %v339 = vsel %vm337, %v251, 0
        %341 = vmatprep.subr.bf16.mxu0 %v328
        %342 = vmatpush1.bf16.msra.mxu0 %v327
        %343 = vmatprep.subr.bf16.mxu0 %v330
        %344 = vmatpush1.bf16.msra.mxu0 %v329
        %345 = vmatprep.subr.bf16.mxu0 %v332
        %346 = vmatpush1.bf16.msra.mxu0 %v331
        %347 = vmatprep.subr.bf16.mxu0 %v334
        %348 = vmatpush1.bf16.msra.mxu0 %v333
        %349 = vmatprep.subr.bf16.mxu0 0
        %350 = vmatpush1.bf16.msra.mxu0 0
        %351 = vmatprep.subr.bf16.mxu0 0
        %352 = vmatpush1.bf16.msra.mxu0 0
        %353 = vmatprep.subr.bf16.mxu0 0
        %354 = vmatpush1.bf16.msra.mxu0 0
        %355 = vmatprep.subr.bf16.mxu0 0
        %356 = vmatpush1.bf16.msra.mxu0 0
        %357 = vmatprep.subr.bf16.mxu0 0
        %358 = vmatpush1.bf16.msra.mxu0 0
        %359 = vmatprep.subr.bf16.mxu0 0
        %360 = vmatpush1.bf16.msra.mxu0 0
        %361 = vmatprep.subr.bf16.mxu0 0
        %362 = vmatpush1.bf16.msra.mxu0 0
        %363 = vmatprep.subr.bf16.mxu0 0
        %364 = vmatpush1.bf16.msra.mxu0 0
        %365 = vmatprep.subr.bf16.mxu0 0
        %366 = vmatpush1.bf16.msra.mxu0 0
        %367 = vmatprep.subr.bf16.mxu0 0
        %368 = vmatpush1.bf16.msra.mxu0 0
        %369 = vmatprep.subr.bf16.mxu0 0
        %370 = vmatpush1.bf16.msra.mxu0 0
        %371 = vmatprep.subr.bf16.mxu0 0
        %372 = vmatpush1.bf16.msra.mxu0 0
        %373 = vmatprep.mubr.bf16.mxu0 0
        %374 = vmatmul.mubr.bf16.gmra.mrb[0].mxu0 %v339
        %v375 = vpop.f32.mrb[0].mxu0
        %v376 = vadd.f32 0.0, %v375
        %v377 = vpop.f32.mrb[0].mxu0
        %v378 = vadd.f32 0.0, %v377
        %v379 = vpop.f32.mrb[0].mxu0
        %v380 = vpop.f32.mrb[0].mxu0
        %381 = vdwg.mxu0
        %v382 = vadd.f32 %v335, %v376
        %v383 = vadd.f32 %v336, %v378
        %384 = vst [vmem:[%s207] sm:$0xff] %v382
        %385 = vst [vmem:[%s207 + $0x8] sm:$0xff] %v383
        %s386 = sand.u32 %s103, 1
        %s387 = scalar_lea.sflag [#allocation3], %s386
        %s388 = sand.u32 %s103, 1
        %s389 = smul.addr %s388, 16
        %s390 = scalar_lea.vmem [#allocation2], %s389
        // Predicated region
        $region33: #{tpu_custom_call.1} parent=27 // pred_check
          %p391 = pneg %p113
        $region34: #{tpu_custom_call.1} parent=27 // pred_check_branch
          %393 = sbr.rel (%p391) target = $region36
        $region35: #{tpu_custom_call.1} parent=27 // pred_region
          %s395 = ssub.s32 256, 256
          %396 = vsyncadd %s387, %s395
          %s397 = smul.addr %s21, 2
          %s398 = smul.addr %s397, 128
          %s399 = scalar_lea.hbm %s2, %s398
          %s401 = sshll.u32 %s390, 4
          %s402 = int_to_ptr.vmem [resolvable:$true] %s401
          %404 = dma.vmem_to_hbm [thread:$0]  %s402, 256, %s399, %s387
        $region36: #{tpu_custom_call.1} parent=27 // pred_fallthru
          _
      $region28: #{tpu_custom_call.1} parent=5 // pred_fallthru
        _
      %p405 = scmp.le.s32.totalorder 2, %s11
      // Predicated region
      $region37: #{tpu_custom_call.1} parent=5 // pred_check
        %p406 = pneg %p405
      $region38: #{tpu_custom_call.1} parent=5 // pred_check_branch
        %408 = sbr.rel (%p406) target = $region40
      $region39: #{tpu_custom_call.1} parent=5 // pred_region
        %s409 = ssub.s32 %s11, 2
        // Predicated region
        $region41: #{tpu_custom_call.1} parent=39 // pred_check
          %p410 = pneg %p119
        $region42: #{tpu_custom_call.1} parent=39 // pred_check_branch
          %412 = sbr.rel (%p410) target = $region44
        $region43: #{tpu_custom_call.1} parent=39 // pred_region
          %s413 = sand.u32 %s104, 1
          %s414 = scalar_lea.sflag [#allocation3], %s413
          %s415 = sand.u32 %s104, 1
          %s416 = smul.addr %s415, 16
          %s417 = scalar_lea.vmem [#allocation2], %s416
          %418 = dma.done %s414, 256
        $region44: #{tpu_custom_call.1} parent=39 // pred_fallthru
          _
      $region40: #{tpu_custom_call.1} parent=5 // pred_fallthru
        _
    $region6: #{tpu_custom_call.1} parent=1 // loop_footer
      %s15 = sadd.s32 1, %s11
    $region7: #{tpu_custom_call.1} parent=1 // loop_footer_branch
      %10 = sbr.rel target = $region3
    $region8: #{tpu_custom_call.1} parent=1 // loop_exit
      _
    %419 = vsyncpa [#allocation3], 1
    %s420 = scalar_lea.sflag [#allocation3], 1
    %421 = vsyncpa %s420, 1

</llo_original>
